<compile_context>
chip_gen: v7x
topology: tpu7x:2x2x1
jax: 0.10.0
libtpu: 0.0.40
codegen_flags: <defaults>
</compile_context>

<pallas_src>
import jax
import jax.numpy as jnp
from jax import lax
from jax.experimental import pallas as pl
from jax.experimental.pallas import tpu as pltpu


def _round_up(x, m):
    return (x + m - 1) // m * m


def _choose_tb(b):
    """Multiple-of-8 batch tile <= 64 minimizing padded rows (largest on tie)."""
    best_tb, best_pad = 8, _round_up(b, 8) - b
    for tb in range(8, 72, 8):
        pad = _round_up(b, tb) - b
        if pad <= best_pad:
            best_tb, best_pad = tb, pad
    return best_tb


def ds_loss(pred, target, target_fn, target_fp):
    B, C, H, W = pred.shape
    assert C == 1, "DS_loss broadcasting in the reference assumes C == 1."
    N = C * H * W

    # Lane-dense 2-D views (reshape of contiguous NCHW is free, no pad copies).
    arrs = [a.reshape(B, N) for a in (pred, target, target_fn, target_fp)]

    # ---- tiling ----------------------------------------------------------
    TB = _choose_tb(B)
    n128 = _round_up(N, 128)
    if n128 <= 512:
        TN = n128
    else:
        tn_cap = min(32768, _round_up(max(512, (1 << 19) // TB), 512))
        TN = min(_round_up(N, 512), tn_cap)
    ACC_W = min(TN, 512)                 # lane width of VMEM accumulators

    n_bb = pl.cdiv(B, TB)                # batch blocks (parallel)
    n_kb = pl.cdiv(N, TN)                # spatial reduction blocks
    # Split the reduction over a leading parallel axis when batch alone can't
    # feed both v7x TensorCores; no-op on v5e/v6e (1 TC).
    n_split = 2 if (n_bb == 1 and n_kb >= 2) else 1
    nk_split = pl.cdiv(n_kb, n_split)
    ragged = (n_split * nk_split * TN) != N   # need in-kernel lane masking?

    # ---- kernel ----------------------------------------------------------
    def kernel(pred_ref, tgt_ref, fn_ref, fp_ref,
               ofn_ref, ofp_ref, oa_ref, ob_ref,
               sfn_ref, sfp_ref, sa_ref, sb_ref):
        c = pl.program_id(0)
        k = pl.program_id(2)
        nk = pl.num_programs(2)

        @pl.when(k == 0)
        def _():
            sfn_ref[...] = jnp.zeros_like(sfn_ref)
            sfp_ref[...] = jnp.zeros_like(sfp_ref)
            sa_ref[...] = jnp.zeros_like(sa_ref)
            sb_ref[...] = jnp.zeros_like(sb_ref)

        # Global (unclamped) spatial block index and its valid lane count.
        g = c * nk + k
        valid = N - g * TN   # >= TN: full block; (0, TN): ragged; <= 0: skip

        def fold(x):
            # (TB, TN) -> (TB, ACC_W) by a tree of static lane-block adds
            # (pure VPU; no cross-lane XLU reduce in the hot loop).
            parts = [x[:, j * ACC_W:(j + 1) * ACC_W] for j in range(TN // ACC_W)]
            while len(parts) > 1:
                nxt = [parts[i] + parts[i + 1]
                       for i in range(0, len(parts) - 1, 2)]
                if len(parts) % 2:
                    nxt.append(parts[-1])
                parts = nxt
            return parts[0]

        def accumulate(mask):
            p = pred_ref[...].astype(jnp.float32)
            tgt = tgt_ref[...].astype(jnp.float32)
            fn = fn_ref[...].astype(jnp.float32)
            fp = fp_ref[...].astype(jnp.float32)
            log_p = jnp.log(p + 1e-8)
            log_1mp = jnp.log(1.0 - p + 1e-8)
            # l1 + l2 folded:  -w*(tgt+fn)*log_p - (1-w)*((1-tgt)+fp)*log_1mp
            term_a = (tgt + fn) * log_p
            term_b = (1.0 - tgt + fp) * log_1mp
            if mask is not None:
                # where-select (not multiply) so garbage lanes (NaN/inf from
                # uninitialized VMEM) can never leak into the sums.
                fn = jnp.where(mask, fn, 0.0)
                fp = jnp.where(mask, fp, 0.0)
                term_a = jnp.where(mask, term_a, 0.0)
                term_b = jnp.where(mask, term_b, 0.0)
            sfn_ref[...] += fold(fn)
            sfp_ref[...] += fold(fp)
            sa_ref[...] += fold(term_a)
            sb_ref[...] += fold(term_b)

        if ragged:
            @pl.when(valid >= TN)
            def _():
                accumulate(None)

            @pl.when(jnp.logical_and(valid > 0, valid < TN))
            def _():
                lanes = lax.broadcasted_iota(jnp.int32, (TB, TN), 1)
                accumulate(lanes < valid)
            # valid <= 0 (over-split tail block): contributes nothing.
        else:
            accumulate(None)

        @pl.when(k == nk - 1)
        def _():
            ofn_ref[...] = jnp.sum(sfn_ref[...], axis=-1, keepdims=True)[None]
            ofp_ref[...] = jnp.sum(sfp_ref[...], axis=-1, keepdims=True)[None]
            oa_ref[...] = jnp.sum(sa_ref[...], axis=-1, keepdims=True)[None]
            ob_ref[...] = jnp.sum(sb_ref[...], axis=-1, keepdims=True)[None]

    # ---- pallas_call -----------------------------------------------------
    in_spec = pl.BlockSpec(
        (TB, TN),
        lambda c, b, k: (b, jnp.minimum(c * nk_split + k, n_kb - 1)))
    out_spec = pl.BlockSpec((1, TB, 1), lambda c, b, k: (c, b, 0))
    out_sds = jax.ShapeDtypeStruct((n_split, B, 1), jnp.float32)

    bytes_in = sum(int(a.size) * a.dtype.itemsize for a in arrs)
    cost = pl.CostEstimate(flops=int(10 * B * N),
                           transcendentals=int(2 * B * N),
                           bytes_accessed=int(bytes_in + 4 * n_split * B * 4))

    sfn, sfp, sa, sb = pl.pallas_call(
        kernel,
        out_shape=(out_sds,) * 4,
        grid=(n_split, n_bb, nk_split),
        in_specs=[in_spec] * 4,
        out_specs=(out_spec,) * 4,
        scratch_shapes=[pltpu.VMEM((TB, ACC_W), jnp.float32)] * 4,
        compiler_params=pltpu.CompilerParams(
            dimension_semantics=("parallel", "parallel", "arbitrary"),
            vmem_limit_bytes=32 * 1024 * 1024),
        cost_estimate=cost,
    )(*arrs)

    # Tiny per-row finalize (B x 4 scalars) in the wrapper: combine split
    # partials, form the per-batch weight, reduce to the scalar loss.
    s_fn = sfn.sum(axis=0)[:, 0]
    s_fp = sfp.sum(axis=0)[:, 0]
    s_a = sa.sum(axis=0)[:, 0]
    s_b = sb.sum(axis=0)[:, 0]
    w = s_fn / (s_fn + s_fp)   # NaN if a row has no fn and no fp (matches ref)
    per_row = -w * s_a - (1.0 - w) * s_b
    # l1.mean() + l2.mean() == (sum(l1) + sum(l2)) / (B*C*H*W)
    return jnp.sum(per_row) / jnp.float32(B * N)


def ds_loss_ref(pred, target, target_fn, target_fp):
    """Pure-JAX f32 reference mirroring the PyTorch forward."""
    pred = pred.astype(jnp.float32)
    target = target.astype(jnp.float32)
    target_fn = target_fn.astype(jnp.float32)
    target_fp = target_fp.astype(jnp.float32)
    s_fn = target_fn.sum(axis=(2, 3))
    s_fp = target_fp.sum(axis=(2, 3))
    w = s_fn / (s_fn + s_fp)                    # (B, C), C == 1
    maps = w[:, :, None, None]
    log_p = jnp.log(pred + 1e-8)
    log_1mp = jnp.log(1.0 - pred + 1e-8)
    l1 = -maps * target * log_p - (1.0 - maps) * (1.0 - target) * log_1mp
    l2 = -maps * target_fn * log_p - (1.0 - maps) * target_fp * log_1mp
    return l1.mean() + l2.mean()


if __name__ == "__main__":
    key = jax.random.PRNGKey(0)

    def make_inputs(k, shape, mask_dtype):
        k_pred, k_tgt, k_fn, k_fp = jax.random.split(k, 4)
        pred = jax.nn.sigmoid(jax.random.normal(k_pred, shape, dtype=jnp.float32))
        target = (jax.random.uniform(k_tgt, shape) > 0.5).astype(mask_dtype)
        target_fn = (jax.random.uniform(k_fn, shape) > 0.7).astype(mask_dtype)
        target_fp = (jax.random.uniform(k_fp, shape) > 0.7).astype(mask_dtype)
        return pred, target, target_fn, target_fp

    k1, k2 = jax.random.split(key)

    # Test 1: small case, all f32, single block.
    inputs1 = make_inputs(k1, (2, 1, 16, 16), jnp.float32)
    out1 = jax.block_until_ready(ds_loss(*inputs1))
    ref1 = jax.block_until_ready(ds_loss_ref(*inputs1))
    assert jnp.allclose(out1, ref1, rtol=1e-5, atol=1e-6), (out1, ref1)

    # Test 2: ragged spatial extent + ragged batch block, bf16 0/1 masks
    # (lossless, less HBM traffic), 2-way reduction split (v7x megacore path).
    inputs2 = make_inputs(k2, (3, 1, 280, 280), jnp.bfloat16)
    out2 = jax.block_until_ready(ds_loss(*inputs2))
    ref2 = jax.block_until_ready(ds_loss_ref(*inputs2))
    assert jnp.allclose(out2, ref2, rtol=1e-4, atol=1e-6), (out2, ref2)

    print("KERNEL_OK")
</pallas_src>

<mosaic_0001>
module attributes {stable_mosaic.version = 11 : i64} {
  func.func @kernel(%arg0: i32, %arg1: i32, %arg2: i32, %arg3: memref<8x256xf32, #tpu.memory_space<vmem>>, %arg4: memref<8x256xf32, #tpu.memory_space<vmem>>, %arg5: memref<8x256xf32, #tpu.memory_space<vmem>>, %arg6: memref<8x256xf32, #tpu.memory_space<vmem>>, %arg7: memref<1x8x1xf32, #tpu.memory_space<vmem>>, %arg8: memref<1x8x1xf32, #tpu.memory_space<vmem>>, %arg9: memref<1x8x1xf32, #tpu.memory_space<vmem>>, %arg10: memref<1x8x1xf32, #tpu.memory_space<vmem>>, %arg11: memref<8x256xf32, #tpu.memory_space<vmem>>, %arg12: memref<8x256xf32, #tpu.memory_space<vmem>>, %arg13: memref<8x256xf32, #tpu.memory_space<vmem>>, %arg14: memref<8x256xf32, #tpu.memory_space<vmem>>) attributes {dimension_semantics = [#tpu.dimension_semantics<parallel>, #tpu.dimension_semantics<parallel>, #tpu.dimension_semantics<arbitrary>], iteration_bounds = array<i64: 1, 1, 1>, scalar_prefetch = 0 : i64, scratch_operands = 4 : i64, tpu.core_type = #tpu.core_type<tc>, window_params = [{transform_indices = @transform_0, window_bounds = array<i64: 8, 256>}, {transform_indices = @transform_1, window_bounds = array<i64: 8, 256>}, {transform_indices = @transform_2, window_bounds = array<i64: 8, 256>}, {transform_indices = @transform_3, window_bounds = array<i64: 8, 256>}, {transform_indices = @transform_4, window_bounds = array<i64: 1, 8, 1>}, {transform_indices = @transform_5, window_bounds = array<i64: 1, 8, 1>}, {transform_indices = @transform_6, window_bounds = array<i64: 1, 8, 1>}, {transform_indices = @transform_7, window_bounds = array<i64: 1, 8, 1>}]} {
    %c0_i32 = arith.constant 0 : i32
    %0 = arith.cmpi eq, %arg2, %c0_i32 : i32
    %1 = arith.extui %0 : i1 to i32
    %c0_i32_0 = arith.constant 0 : i32
    %2 = arith.cmpi ne, %1, %c0_i32_0 : i32
    scf.if %2 {
      %cst_29 = arith.constant 0.000000e+00 : f32
      %36 = vector.broadcast %cst_29 : f32 to vector<8x256xf32>
      %c0_30 = arith.constant 0 : index
      %c0_31 = arith.constant 0 : index
      %37 = vector.load %arg11[%c0_30, %c0_31] : memref<8x256xf32, #tpu.memory_space<vmem>>, vector<8x256xf32>
      tpu.vector_store %arg11[%c0_30, %c0_31], %36 {strides = array<i32>} : memref<8x256xf32, #tpu.memory_space<vmem>>, vector<8x256xf32>,
      %cst_32 = arith.constant 0.000000e+00 : f32
      %38 = vector.broadcast %cst_32 : f32 to vector<8x256xf32>
      %c0_33 = arith.constant 0 : index
      %c0_34 = arith.constant 0 : index
      %39 = vector.load %arg12[%c0_33, %c0_34] : memref<8x256xf32, #tpu.memory_space<vmem>>, vector<8x256xf32>
      tpu.vector_store %arg12[%c0_33, %c0_34], %38 {strides = array<i32>} : memref<8x256xf32, #tpu.memory_space<vmem>>, vector<8x256xf32>,
      %cst_35 = arith.constant 0.000000e+00 : f32
      %40 = vector.broadcast %cst_35 : f32 to vector<8x256xf32>
      %c0_36 = arith.constant 0 : index
      %c0_37 = arith.constant 0 : index
      %41 = vector.load %arg13[%c0_36, %c0_37] : memref<8x256xf32, #tpu.memory_space<vmem>>, vector<8x256xf32>
      tpu.vector_store %arg13[%c0_36, %c0_37], %40 {strides = array<i32>} : memref<8x256xf32, #tpu.memory_space<vmem>>, vector<8x256xf32>,
      %cst_38 = arith.constant 0.000000e+00 : f32
      %42 = vector.broadcast %cst_38 : f32 to vector<8x256xf32>
      %c0_39 = arith.constant 0 : index
      %c0_40 = arith.constant 0 : index
      %43 = vector.load %arg14[%c0_39, %c0_40] : memref<8x256xf32, #tpu.memory_space<vmem>>, vector<8x256xf32>
      tpu.vector_store %arg14[%c0_39, %c0_40], %42 {strides = array<i32>} : memref<8x256xf32, #tpu.memory_space<vmem>>, vector<8x256xf32>,
    } else {
    }
    %c0 = arith.constant 0 : index
    %c0_1 = arith.constant 0 : index
    %3 = vector.load %arg3[%c0, %c0_1] : memref<8x256xf32, #tpu.memory_space<vmem>>, vector<8x256xf32>
    %c0_2 = arith.constant 0 : index
    %c0_3 = arith.constant 0 : index
    %4 = vector.load %arg4[%c0_2, %c0_3] : memref<8x256xf32, #tpu.memory_space<vmem>>, vector<8x256xf32>
    %c0_4 = arith.constant 0 : index
    %c0_5 = arith.constant 0 : index
    %5 = vector.load %arg5[%c0_4, %c0_5] : memref<8x256xf32, #tpu.memory_space<vmem>>, vector<8x256xf32>
    %c0_6 = arith.constant 0 : index
    %c0_7 = arith.constant 0 : index
    %6 = vector.load %arg6[%c0_6, %c0_7] : memref<8x256xf32, #tpu.memory_space<vmem>>, vector<8x256xf32>
    %cst = arith.constant 9.99999993E-9 : f32
    %7 = vector.broadcast %cst : f32 to vector<8x256xf32>
    %8 = arith.addf %3, %7 : vector<8x256xf32>
    %9 = math.log %8 : vector<8x256xf32>
    %cst_8 = arith.constant 1.000000e+00 : f32
    %10 = vector.broadcast %cst_8 : f32 to vector<8x256xf32>
    %11 = arith.subf %10, %3 : vector<8x256xf32>
    %cst_9 = arith.constant 9.99999993E-9 : f32
    %12 = vector.broadcast %cst_9 : f32 to vector<8x256xf32>
    %13 = arith.addf %11, %12 : vector<8x256xf32>
    %14 = math.log %13 : vector<8x256xf32>
    %15 = arith.addf %4, %5 : vector<8x256xf32>
    %16 = arith.mulf %15, %9 : vector<8x256xf32>
    %cst_10 = arith.constant 1.000000e+00 : f32
    %17 = vector.broadcast %cst_10 : f32 to vector<8x256xf32>
    %18 = arith.subf %17, %4 : vector<8x256xf32>
    %19 = arith.addf %18, %6 : vector<8x256xf32>
    %20 = arith.mulf %19, %14 : vector<8x256xf32>
    %c0_11 = arith.constant 0 : index
    %c0_12 = arith.constant 0 : index
    %21 = vector.load %arg11[%c0_11, %c0_12] : memref<8x256xf32, #tpu.memory_space<vmem>>, vector<8x256xf32>
    %22 = arith.addf %21, %5 : vector<8x256xf32>
    %c0_13 = arith.constant 0 : index
    %c0_14 = arith.constant 0 : index
    %23 = vector.load %arg11[%c0_13, %c0_14] : memref<8x256xf32, #tpu.memory_space<vmem>>, vector<8x256xf32>
    tpu.vector_store %arg11[%c0_13, %c0_14], %22 {strides = array<i32>} : memref<8x256xf32, #tpu.memory_space<vmem>>, vector<8x256xf32>,
    %c0_15 = arith.constant 0 : index
    %c0_16 = arith.constant 0 : index
    %24 = vector.load %arg12[%c0_15, %c0_16] : memref<8x256xf32, #tpu.memory_space<vmem>>, vector<8x256xf32>
    %25 = arith.addf %24, %6 : vector<8x256xf32>
    %c0_17 = arith.constant 0 : index
    %c0_18 = arith.constant 0 : index
    %26 = vector.load %arg12[%c0_17, %c0_18] : memref<8x256xf32, #tpu.memory_space<vmem>>, vector<8x256xf32>
    tpu.vector_store %arg12[%c0_17, %c0_18], %25 {strides = array<i32>} : memref<8x256xf32, #tpu.memory_space<vmem>>, vector<8x256xf32>,
    %c0_19 = arith.constant 0 : index
    %c0_20 = arith.constant 0 : index
    %27 = vector.load %arg13[%c0_19, %c0_20] : memref<8x256xf32, #tpu.memory_space<vmem>>, vector<8x256xf32>
    %28 = arith.addf %27, %16 : vector<8x256xf32>
    %c0_21 = arith.constant 0 : index
    %c0_22 = arith.constant 0 : index
    %29 = vector.load %arg13[%c0_21, %c0_22] : memref<8x256xf32, #tpu.memory_space<vmem>>, vector<8x256xf32>
    tpu.vector_store %arg13[%c0_21, %c0_22], %28 {strides = array<i32>} : memref<8x256xf32, #tpu.memory_space<vmem>>, vector<8x256xf32>,
    %c0_23 = arith.constant 0 : index
    %c0_24 = arith.constant 0 : index
    %30 = vector.load %arg14[%c0_23, %c0_24] : memref<8x256xf32, #tpu.memory_space<vmem>>, vector<8x256xf32>
    %31 = arith.addf %30, %20 : vector<8x256xf32>
    %c0_25 = arith.constant 0 : index
    %c0_26 = arith.constant 0 : index
    %32 = vector.load %arg14[%c0_25, %c0_26] : memref<8x256xf32, #tpu.memory_space<vmem>>, vector<8x256xf32>
    tpu.vector_store %arg14[%c0_25, %c0_26], %31 {strides = array<i32>} : memref<8x256xf32, #tpu.memory_space<vmem>>, vector<8x256xf32>,
    %c0_i32_27 = arith.constant 0 : i32
    %33 = arith.cmpi eq, %arg2, %c0_i32_27 : i32
    %34 = arith.extui %33 : i1 to i32
    %c0_i32_28 = arith.constant 0 : i32
    %35 = arith.cmpi ne, %34, %c0_i32_28 : i32
    scf.if %35 {
      %c0_29 = arith.constant 0 : index
      %c0_30 = arith.constant 0 : index
      %36 = vector.load %arg11[%c0_29, %c0_30] : memref<8x256xf32, #tpu.memory_space<vmem>>, vector<8x256xf32>
      %cst_31 = arith.constant dense<0.000000e+00> : vector<8xf32>
      %37 = vector.multi_reduction <add>, %36, %cst_31 [1] : vector<8x256xf32> to vector<8xf32>
      %38 = vector.shape_cast %37 : vector<8xf32> to vector<8x1xf32>
      %39 = vector.shape_cast %38 : vector<8x1xf32> to vector<1x8x1xf32>
      %c0_32 = arith.constant 0 : index
      %c0_33 = arith.constant 0 : index
      %c0_34 = arith.constant 0 : index
      %40 = vector.load %arg7[%c0_32, %c0_33, %c0_34] : memref<1x8x1xf32, #tpu.memory_space<vmem>>, vector<1x8x1xf32>
      tpu.vector_store %arg7[%c0_32, %c0_33, %c0_34], %39 {strides = array<i32>} : memref<1x8x1xf32, #tpu.memory_space<vmem>>, vector<1x8x1xf32>,
      %c0_35 = arith.constant 0 : index
      %c0_36 = arith.constant 0 : index
      %41 = vector.load %arg12[%c0_35, %c0_36] : memref<8x256xf32, #tpu.memory_space<vmem>>, vector<8x256xf32>
      %cst_37 = arith.constant dense<0.000000e+00> : vector<8xf32>
      %42 = vector.multi_reduction <add>, %41, %cst_37 [1] : vector<8x256xf32> to vector<8xf32>
      %43 = vector.shape_cast %42 : vector<8xf32> to vector<8x1xf32>
      %44 = vector.shape_cast %43 : vector<8x1xf32> to vector<1x8x1xf32>
      %c0_38 = arith.constant 0 : index
      %c0_39 = arith.constant 0 : index
      %c0_40 = arith.constant 0 : index
      %45 = vector.load %arg8[%c0_38, %c0_39, %c0_40] : memref<1x8x1xf32, #tpu.memory_space<vmem>>, vector<1x8x1xf32>
      tpu.vector_store %arg8[%c0_38, %c0_39, %c0_40], %44 {strides = array<i32>} : memref<1x8x1xf32, #tpu.memory_space<vmem>>, vector<1x8x1xf32>,
      %c0_41 = arith.constant 0 : index
      %c0_42 = arith.constant 0 : index
      %46 = vector.load %arg13[%c0_41, %c0_42] : memref<8x256xf32, #tpu.memory_space<vmem>>, vector<8x256xf32>
      %cst_43 = arith.constant dense<0.000000e+00> : vector<8xf32>
      %47 = vector.multi_reduction <add>, %46, %cst_43 [1] : vector<8x256xf32> to vector<8xf32>
      %48 = vector.shape_cast %47 : vector<8xf32> to vector<8x1xf32>
      %49 = vector.shape_cast %48 : vector<8x1xf32> to vector<1x8x1xf32>
      %c0_44 = arith.constant 0 : index
      %c0_45 = arith.constant 0 : index
      %c0_46 = arith.constant 0 : index
      %50 = vector.load %arg9[%c0_44, %c0_45, %c0_46] : memref<1x8x1xf32, #tpu.memory_space<vmem>>, vector<1x8x1xf32>
      tpu.vector_store %arg9[%c0_44, %c0_45, %c0_46], %49 {strides = array<i32>} : memref<1x8x1xf32, #tpu.memory_space<vmem>>, vector<1x8x1xf32>,
      %c0_47 = arith.constant 0 : index
      %c0_48 = arith.constant 0 : index
      %51 = vector.load %arg14[%c0_47, %c0_48] : memref<8x256xf32, #tpu.memory_space<vmem>>, vector<8x256xf32>
      %cst_49 = arith.constant dense<0.000000e+00> : vector<8xf32>
      %52 = vector.multi_reduction <add>, %51, %cst_49 [1] : vector<8x256xf32> to vector<8xf32>
      %53 = vector.shape_cast %52 : vector<8xf32> to vector<8x1xf32>
      %54 = vector.shape_cast %53 : vector<8x1xf32> to vector<1x8x1xf32>
      %c0_50 = arith.constant 0 : index
      %c0_51 = arith.constant 0 : index
      %c0_52 = arith.constant 0 : index
      %55 = vector.load %arg10[%c0_50, %c0_51, %c0_52] : memref<1x8x1xf32, #tpu.memory_space<vmem>>, vector<1x8x1xf32>
      tpu.vector_store %arg10[%c0_50, %c0_51, %c0_52], %54 {strides = array<i32>} : memref<1x8x1xf32, #tpu.memory_space<vmem>>, vector<1x8x1xf32>,
    } else {
    }
    return
  }
  func.func @transform_0(%arg0: i32, %arg1: i32, %arg2: i32) -> (i32, i32) {
    %c1_i32 = arith.constant 1 : i32
    %0 = arith.muli %arg0, %c1_i32 : i32
    %1 = arith.addi %0, %arg2 : i32
    %c0_i32 = arith.constant 0 : i32
    %2 = arith.minsi %1, %c0_i32 : i32
    %c0_i32_0 = arith.constant 0 : i32
    return %arg1, %2 : i32, i32
  }
  func.func @transform_1(%arg0: i32, %arg1: i32, %arg2: i32) -> (i32, i32) {
    %c1_i32 = arith.constant 1 : i32
    %0 = arith.muli %arg0, %c1_i32 : i32
    %1 = arith.addi %0, %arg2 : i32
    %c0_i32 = arith.constant 0 : i32
    %2 = arith.minsi %1, %c0_i32 : i32
    %c0_i32_0 = arith.constant 0 : i32
    return %arg1, %2 : i32, i32
  }
  func.func @transform_2(%arg0: i32, %arg1: i32, %arg2: i32) -> (i32, i32) {
    %c1_i32 = arith.constant 1 : i32
    %0 = arith.muli %arg0, %c1_i32 : i32
    %1 = arith.addi %0, %arg2 : i32
    %c0_i32 = arith.constant 0 : i32
    %2 = arith.minsi %1, %c0_i32 : i32
    %c0_i32_0 = arith.constant 0 : i32
    return %arg1, %2 : i32, i32
  }
  func.func @transform_3(%arg0: i32, %arg1: i32, %arg2: i32) -> (i32, i32) {
    %c1_i32 = arith.constant 1 : i32
    %0 = arith.muli %arg0, %c1_i32 : i32
    %1 = arith.addi %0, %arg2 : i32
    %c0_i32 = arith.constant 0 : i32
    %2 = arith.minsi %1, %c0_i32 : i32
    %c0_i32_0 = arith.constant 0 : i32
    return %arg1, %2 : i32, i32
  }
  func.func @transform_4(%arg0: i32, %arg1: i32, %arg2: i32) -> (i32, i32, i32) {
    %c0_i32 = arith.constant 0 : i32
    %c0_i32_0 = arith.constant 0 : i32
    return %arg0, %arg1, %c0_i32 : i32, i32, i32
  }
  func.func @transform_5(%arg0: i32, %arg1: i32, %arg2: i32) -> (i32, i32, i32) {
    %c0_i32 = arith.constant 0 : i32
    %c0_i32_0 = arith.constant 0 : i32
    return %arg0, %arg1, %c0_i32 : i32, i32, i32
  }
  func.func @transform_6(%arg0: i32, %arg1: i32, %arg2: i32) -> (i32, i32, i32) {
    %c0_i32 = arith.constant 0 : i32
    %c0_i32_0 = arith.constant 0 : i32
    return %arg0, %arg1, %c0_i32 : i32, i32, i32
  }
  func.func @transform_7(%arg0: i32, %arg1: i32, %arg2: i32) -> (i32, i32, i32) {
    %c0_i32 = arith.constant 0 : i32
    %c0_i32_0 = arith.constant 0 : i32
    return %arg0, %arg1, %c0_i32 : i32, i32, i32
  }
}

</mosaic_0001>

<llo_original>
// kernel: tpu_custom_call.1
$region0: #{tpu_custom_call.1}
  #allocation0 [shape = 'u32[]', space=smem, size = 0x4, offset = 0x4, fixed_abs, tag = 'smem constant byte address 0x4 - core index']
  #allocation1 [shape = 'u32[144,128]{1,0:T(1,128)}', space=vmem, size = 0x12000, scoped, tag = 'internal scratch']
  #allocation2 [shape = 'f32[8,256]{1,0:T(8,128)}', space=vmem, size = 0x2000, scoped, tag = 'scratch operand']
  #allocation3 [shape = 'f32[8,256]{1,0:T(8,128)}', space=vmem, size = 0x2000, scoped, tag = 'scratch operand']
  #allocation4 [shape = 'f32[8,256]{1,0:T(8,128)}', space=vmem, size = 0x2000, scoped, tag = 'scratch operand']
  #allocation5 [shape = 'f32[8,256]{1,0:T(8,128)}', space=vmem, size = 0x2000, scoped, tag = 'scratch operand']
  %s0 = inlined_call_operand.hbm [shape: f32[2,256], index: 0, kind: input, shape index: {}]
  %s1 = inlined_call_operand.hbm [shape: f32[2,256], index: 1, kind: input, shape index: {}]
  %s2 = inlined_call_operand.vmem [shape: f32[2,256], index: 2, kind: input, shape index: {}]
  %s3 = inlined_call_operand.vmem [shape: f32[2,256], index: 3, kind: input, shape index: {}]
  %s4 = inlined_call_operand.vmem [shape: f32[1,2,1], index: 4, kind: output, shape index: {0}]
  %s5 = inlined_call_operand.vmem [shape: f32[1,2,1], index: 5, kind: output, shape index: {1}]
  %s6 = inlined_call_operand.vmem [shape: f32[1,2,1], index: 6, kind: output, shape index: {2}]
  %s7 = inlined_call_operand.vmem [shape: f32[1,2,1], index: 7, kind: output, shape index: {3}]
  %8 = xla_tuple %s4, %s5, %s6, %s7
  %s9 = sld [smem:[#allocation0]]
  $region186: #{tpu_custom_call.1} parent=0
    _
  %s11 = ssub.s32 1, %s9
  %s12 = scalar_select 0, %s11, %s9
  $region1: #{tpu_custom_call.1} parent=0
    #allocation6 [shape = 'u8[8192]{0}', space=vmem, size = 0x2000, scoped, tag = 'input window, operand 0, single buffered']
    #allocation7 [shape = 's32[1]{0}', space=sflag, size = 0x4, scoped, tag = 'scoped memory for tpu_custom_call.1']
    #allocation8 [shape = 'u8[8192]{0}', space=vmem, size = 0x2000, scoped, tag = 'input window, operand 1, single buffered']
    #allocation9 [shape = 's32[1]{0}', space=sflag, size = 0x4, scoped, tag = 'scoped memory for tpu_custom_call.1']
    #allocation10 [shape = 'u8[4096]{0}', space=vmem, size = 0x1000, scoped, tag = 'output window, operand 0, single buffered']
    #allocation11 [shape = 'u8[4096]{0}', space=vmem, size = 0x1000, scoped, tag = 'output window, operand 1, single buffered']
    #allocation12 [shape = 'u8[4096]{0}', space=vmem, size = 0x1000, scoped, tag = 'output window, operand 2, single buffered']
    #allocation13 [shape = 'u8[4096]{0}', space=vmem, size = 0x1000, scoped, tag = 'output window, operand 3, single buffered']
    %13 = vsyncpa [#allocation7], 0
    %14 = vsyncpa [#allocation9], 0
    // Predicated region
    $region2: #{tpu_custom_call.1} parent=1 // pred_check
      _
    $region3: #{tpu_custom_call.1} parent=1 // pred_check_branch
      %16 = sbr.rel (0) target = $region5
    $region4: #{tpu_custom_call.1} parent=1 // pred_region
      %s17 = sadd.s32 0, 0
      %p18 = scmp.lt.s32.totalorder %s17, 0
      %s19 = scalar_select %p18, %s17, 0
      %s20 = smul.u32 2, %s19
      %s22 = ssub.s32 256, 64
      %23 = vsyncadd [#allocation7], %s22
      %s24 = smul.addr %s20, 32
      %s25 = scalar_lea.hbm %s0, %s24
      %s26 = sshll.u32 [#allocation6], 4
      %s27 = int_to_ptr.vmem [resolvable:$true] %s26
      %32 = dma.hbm_to_vmem [thread:$0]  %s25, 64, %s27, [#allocation7], 64, 64, 4
    $region5: #{tpu_custom_call.1} parent=1 // pred_fallthru
      _
    // Predicated region
    $region6: #{tpu_custom_call.1} parent=1 // pred_check
      _
    $region7: #{tpu_custom_call.1} parent=1 // pred_check_branch
      %34 = sbr.rel (0) target = $region9
    $region8: #{tpu_custom_call.1} parent=1 // pred_region
      %s35 = sadd.s32 0, 0
      %p36 = scmp.lt.s32.totalorder %s35, 0
      %s37 = scalar_select %p36, %s35, 0
      %s38 = smul.u32 2, %s37
      %s40 = ssub.s32 256, 64
      %41 = vsyncadd [#allocation9], %s40
      %s42 = smul.addr %s38, 32
      %s43 = scalar_lea.hbm %s1, %s42
      %s44 = sshll.u32 [#allocation8], 4
      %s45 = int_to_ptr.vmem [resolvable:$true] %s44
      %50 = dma.hbm_to_vmem [thread:$0]  %s43, 64, %s45, [#allocation9], 64, 64, 4
    $region9: #{tpu_custom_call.1} parent=1 // pred_fallthru
      _
    // Predicated region
    $region10: #{tpu_custom_call.1} parent=1 // pred_check
      _
    $region11: #{tpu_custom_call.1} parent=1 // pred_check_branch
      %52 = sbr.rel (0) target = $region13
    $region12: #{tpu_custom_call.1} parent=1 // pred_region
      %s53 = sadd.s32 0, 0
      %p54 = scmp.lt.s32.totalorder %s53, 0
      %s55 = scalar_select %p54, %s53, 0
      %s56 = smul.u32 2, %s55
      %p57 = scmp.lt.s32.totalorder %s56, 1
      %s58 = scalar_select %p57, %s56, 1
      %s59 = smul.addr %s58, 2
      %s60 = scalar_lea.vmem %s2, %s59
      %s61 = sadd.s32 0, 0
      %p62 = scmp.lt.s32.totalorder %s61, 0
      %s63 = scalar_select %p62, %s61, 0
      %s64 = smul.u32 2, %s63
    $region13: #{tpu_custom_call.1} parent=1 // pred_fallthru
      _
    // Predicated region
    $region14: #{tpu_custom_call.1} parent=1 // pred_check
      _
    $region15: #{tpu_custom_call.1} parent=1 // pred_check_branch
      %66 = sbr.rel (0) target = $region17
    $region16: #{tpu_custom_call.1} parent=1 // pred_region
      %s67 = sadd.s32 0, 0
      %p68 = scmp.lt.s32.totalorder %s67, 0
      %s69 = scalar_select %p68, %s67, 0
      %s70 = smul.u32 2, %s69
      %p71 = scmp.lt.s32.totalorder %s70, 1
      %s72 = scalar_select %p71, %s70, 1
      %s73 = smul.addr %s72, 2
      %s74 = scalar_lea.vmem %s3, %s73
      %s75 = sadd.s32 0, 0
      %p76 = scmp.lt.s32.totalorder %s75, 0
      %s77 = scalar_select %p76, %s75, 0
      %s78 = smul.u32 2, %s77
    $region17: #{tpu_custom_call.1} parent=1 // pred_fallthru
      _
    // Predicated region
    $region18: #{tpu_custom_call.1} parent=1 // pred_check
      _
    $region19: #{tpu_custom_call.1} parent=1 // pred_check_branch
      %80 = sbr.rel (0) target = $region21
    $region20: #{tpu_custom_call.1} parent=1 // pred_region
      %81 = dma.done [#allocation7], 256
    $region21: #{tpu_custom_call.1} parent=1 // pred_fallthru
      _
    // Predicated region
    $region22: #{tpu_custom_call.1} parent=1 // pred_check
      _
    $region23: #{tpu_custom_call.1} parent=1 // pred_check_branch
      %83 = sbr.rel (0) target = $region25
    $region24: #{tpu_custom_call.1} parent=1 // pred_region
      %84 = dma.done [#allocation9], 256
    $region25: #{tpu_custom_call.1} parent=1 // pred_fallthru
      _
    %s85 = sadd.s32 0, 0
    %p86 = scmp.lt.s32.totalorder %s85, 0
    %s87 = scalar_select %p86, %s85, 0
    %s88 = smul.u32 2, %s87
    %p89 = scmp.lt.s32.totalorder %s88, 1
    %s90 = scalar_select %p89, %s88, 1
    %s91 = smul.addr %s90, 2
    %s92 = scalar_lea.vmem %s2, %s91
    %s93 = sadd.s32 0, 0
    %p94 = scmp.lt.s32.totalorder %s93, 0
    %s95 = scalar_select %p94, %s93, 0
    %s96 = smul.u32 2, %s95
    %p97 = scmp.lt.s32.totalorder %s96, 1
    %s98 = scalar_select %p97, %s96, 1
    %s99 = smul.addr %s98, 2
    %s100 = scalar_lea.vmem %s3, %s99
    %s101 = sadd.s32 0, 0
    %p102 = scmp.lt.s32.totalorder %s101, 0
    %s103 = scalar_select %p102, %s101, 0
    %s104 = smul.u32 2, %s103
    %s105 = sadd.s32 0, 0
    %p106 = scmp.lt.s32.totalorder %s105, 0
    %s107 = scalar_select %p106, %s105, 0
    %s108 = smul.u32 2, %s107
    %s109 = sadd.s32 0, 0
    %p110 = scmp.lt.s32.totalorder %s109, 0
    %s111 = scalar_select %p110, %s109, 0
    %s112 = smul.u32 2, %s111
    %p113 = scmp.lt.s32.totalorder %s112, 1
    %s114 = scalar_select %p113, %s112, 1
    %s115 = smul.addr %s114, 2
    %s116 = scalar_lea.vmem %s2, %s115
    %s117 = sadd.s32 0, 0
    %p118 = scmp.lt.s32.totalorder %s117, 0
    %s119 = scalar_select %p118, %s117, 0
    %s120 = smul.u32 2, %s119
    %s121 = sadd.s32 0, 0
    %p122 = scmp.lt.s32.totalorder %s121, 0
    %s123 = scalar_select %p122, %s121, 0
    %s124 = smul.u32 2, %s123
    %p125 = scmp.lt.s32.totalorder %s124, 1
    %s126 = scalar_select %p125, %s124, 1
    %s127 = smul.addr %s126, 2
    %s128 = scalar_lea.vmem %s3, %s127
    %s129 = sadd.s32 0, 0
    %p130 = scmp.lt.s32.totalorder %s129, 0
    %s131 = scalar_select %p130, %s129, 0
    %s132 = smul.u32 2, %s131
    %p133 = scmp.eq.s32.totalorder 0, 0
    // Predicated region
    $region26: #{tpu_custom_call.1} parent=1 // pred_check
      %p134 = pneg %p133
    $region27: #{tpu_custom_call.1} parent=1 // pred_check_branch
      %136 = sbr.rel (%p134) target = $region29
    $region28: #{tpu_custom_call.1} parent=1 // pred_region
      %137 = vst [vmem:[#allocation2] sm:$0xff] 0.0
      %138 = vst [vmem:[#allocation2 + $0x8] sm:$0xff] 0.0
      %139 = vst [vmem:[#allocation3] sm:$0xff] 0.0
      %140 = vst [vmem:[#allocation3 + $0x8] sm:$0xff] 0.0
      %141 = vst [vmem:[#allocation4] sm:$0xff] 0.0
      %142 = vst [vmem:[#allocation4 + $0x8] sm:$0xff] 0.0
      %143 = vst [vmem:[#allocation5] sm:$0xff] 0.0
      %144 = vst [vmem:[#allocation5 + $0x8] sm:$0xff] 0.0
    $region29: #{tpu_custom_call.1} parent=1 // pred_fallthru
      _
    %v145 = vld [vmem:[#allocation6] sm:$0xf]
    %v146 = vld [vmem:[#allocation6 + $0x4] sm:$0xf]
    %v147 = vld [vmem:[#allocation6 + $0x8] sm:$0xf]
    %v148 = vld [vmem:[#allocation6 + $0xc] sm:$0xf]
    %v149 = vld [vmem:[#allocation8] sm:$0xf]
    %v150 = vld [vmem:[#allocation8 + $0x4] sm:$0xf]
    %v151 = vld [vmem:[#allocation8 + $0x8] sm:$0xf]
    %v152 = vld [vmem:[#allocation8 + $0xc] sm:$0xf]
    %v153 = vld [vmem:[%s116] sm:$0xf]
    %v154 = vld [vmem:[%s116 + $0x4] sm:$0xf]
    %v155 = vld [vmem:[%s116 + $0x8] sm:$0xf]
    %v156 = vld [vmem:[%s116 + $0xc] sm:$0xf]
    %v157 = vld [vmem:[%s128] sm:$0xf]
    %v158 = vld [vmem:[%s128 + $0x4] sm:$0xf]
    %v159 = vld [vmem:[%s128 + $0x8] sm:$0xf]
    %v160 = vld [vmem:[%s128 + $0xc] sm:$0xf]
    %v161 = vadd.f32 %v145, 1e-08
    %v162 = vadd.f32 %v146, 1e-08
    %v163 = vadd.f32 %v147, 1e-08
    %v164 = vadd.f32 %v148, 1e-08
    %v165 = vlog2.pop %v161
    %v166 = vmul.f32 %v165, 0.6931472
    %v167 = vlog2.pop %v162
    %v168 = vmul.f32 %v167, 0.6931472
    %v169 = vlog2.pop %v163
    %v170 = vmul.f32 %v169, 0.6931472
    %v171 = vlog2.pop %v164
    %v172 = vmul.f32 %v171, 0.6931472
    %v173 = vsub.f32 1.0, %v145
    %v174 = vsub.f32 1.0, %v146
    %v175 = vsub.f32 1.0, %v147
    %v176 = vsub.f32 1.0, %v148
    %v177 = vadd.f32 %v173, 1e-08
    %v178 = vadd.f32 %v174, 1e-08
    %v179 = vadd.f32 %v175, 1e-08
    %v180 = vadd.f32 %v176, 1e-08
    %v181 = vlog2.pop %v177
    %v182 = vmul.f32 %v181, 0.6931472
    %v183 = vlog2.pop %v178
    %v184 = vmul.f32 %v183, 0.6931472
    %v185 = vlog2.pop %v179
    %v186 = vmul.f32 %v185, 0.6931472
    %v187 = vlog2.pop %v180
    %v188 = vmul.f32 %v187, 0.6931472
    %v189 = vadd.f32 %v149, %v153
    %v190 = vadd.f32 %v150, %v154
    %v191 = vadd.f32 %v151, %v155
    %v192 = vadd.f32 %v152, %v156
    %v193 = vmul.f32 %v189, %v166
    %v194 = vmul.f32 %v190, %v168
    %v195 = vmul.f32 %v191, %v170
    %v196 = vmul.f32 %v192, %v172
    %v197 = vsub.f32 1.0, %v149
    %v198 = vsub.f32 1.0, %v150
    %v199 = vsub.f32 1.0, %v151
    %v200 = vsub.f32 1.0, %v152
    %v201 = vadd.f32 %v197, %v157
    %v202 = vadd.f32 %v198, %v158
    %v203 = vadd.f32 %v199, %v159
    %v204 = vadd.f32 %v200, %v160
    %v205 = vmul.f32 %v201, %v182
    %v206 = vmul.f32 %v202, %v184
    %v207 = vmul.f32 %v203, %v186
    %v208 = vmul.f32 %v204, %v188
    %v209 = vld [vmem:[#allocation2] sm:$0xff]
    %v210 = vld [vmem:[#allocation2 + $0x8] sm:$0xff]
    %v215 = vcombine.low %v153, %v154
    %v216 = vcombine.low %v155, %v156
    %v218 = vunpack.c.l.s4 1983009808
    %v219 = vunpack.c.0.s8 %v218
    %v220 = vlaneseq
    %v221 = vshrl.u32 %v220, 7
    %v222 = vsub.s32 %v219, %v221
    %v223 = vrot.slane %v215, %v222
    %v225 = vunpack.c.l.s4 1983009808
    %v226 = vunpack.c.0.s8 %v225
    %v227 = vlaneseq
    %v228 = vshrl.u32 %v227, 7
    %v229 = vsub.s32 %v226, %v228
    %v230 = vrot.slane %v216, %v229
    %v231 = vcombine.low %v223, %v230
    %v232 = vcombine.high %v223, %v230
    %v235 = vadd.f32 %v209, %v231
    %v236 = vadd.f32 %v210, %v232
    %237 = vst [vmem:[#allocation2] sm:$0xff] %v235
    %238 = vst [vmem:[#allocation2 + $0x8] sm:$0xff] %v236
    %v239 = vld [vmem:[#allocation3] sm:$0xff]
    %v240 = vld [vmem:[#allocation3 + $0x8] sm:$0xff]
    %v245 = vcombine.low %v157, %v158
    %v246 = vcombine.low %v159, %v160
    %v248 = vunpack.c.l.s4 1983009808
    %v249 = vunpack.c.0.s8 %v248
    %v250 = vlaneseq
    %v251 = vshrl.u32 %v250, 7
    %v252 = vsub.s32 %v249, %v251
    %v253 = vrot.slane %v245, %v252
    %v255 = vunpack.c.l.s4 1983009808
    %v256 = vunpack.c.0.s8 %v255
    %v257 = vlaneseq
    %v258 = vshrl.u32 %v257, 7
    %v259 = vsub.s32 %v256, %v258
    %v260 = vrot.slane %v246, %v259
    %v261 = vcombine.low %v253, %v260
    %v262 = vcombine.high %v253, %v260
    %v265 = vadd.f32 %v239, %v261
    %v266 = vadd.f32 %v240, %v262
    %267 = vst [vmem:[#allocation3] sm:$0xff] %v265
    %268 = vst [vmem:[#allocation3 + $0x8] sm:$0xff] %v266
    %v269 = vld [vmem:[#allocation4] sm:$0xff]
    %v270 = vld [vmem:[#allocation4 + $0x8] sm:$0xff]
    %v275 = vcombine.low %v193, %v194
    %v276 = vcombine.low %v195, %v196
    %v278 = vunpack.c.l.s4 1983009808
    %v279 = vunpack.c.0.s8 %v278
    %v280 = vlaneseq
    %v281 = vshrl.u32 %v280, 7
    %v282 = vsub.s32 %v279, %v281
    %v283 = vrot.slane %v275, %v282
    %v285 = vunpack.c.l.s4 1983009808
    %v286 = vunpack.c.0.s8 %v285
    %v287 = vlaneseq
    %v288 = vshrl.u32 %v287, 7
    %v289 = vsub.s32 %v286, %v288
    %v290 = vrot.slane %v276, %v289
    %v291 = vcombine.low %v283, %v290
    %v292 = vcombine.high %v283, %v290
    %v295 = vadd.f32 %v269, %v291
    %v296 = vadd.f32 %v270, %v292
    %297 = vst [vmem:[#allocation4] sm:$0xff] %v295
    %298 = vst [vmem:[#allocation4 + $0x8] sm:$0xff] %v296
    %v299 = vld [vmem:[#allocation5] sm:$0xff]
    %v300 = vld [vmem:[#allocation5 + $0x8] sm:$0xff]
    %v305 = vcombine.low %v205, %v206
    %v306 = vcombine.low %v207, %v208
    %v308 = vunpack.c.l.s4 1983009808
    %v309 = vunpack.c.0.s8 %v308
    %v310 = vlaneseq
    %v311 = vshrl.u32 %v310, 7
    %v312 = vsub.s32 %v309, %v311
    %v313 = vrot.slane %v305, %v312
    %v315 = vunpack.c.l.s4 1983009808
    %v316 = vunpack.c.0.s8 %v315
    %v317 = vlaneseq
    %v318 = vshrl.u32 %v317, 7
    %v319 = vsub.s32 %v316, %v318
    %v320 = vrot.slane %v306, %v319
    %v321 = vcombine.low %v313, %v320
    %v322 = vcombine.high %v313, %v320
    %v325 = vadd.f32 %v299, %v321
    %v326 = vadd.f32 %v300, %v322
    %327 = vst [vmem:[#allocation5] sm:$0xff] %v325
    %328 = vst [vmem:[#allocation5 + $0x8] sm:$0xff] %v326
    // Predicated region
    $region30: #{tpu_custom_call.1} parent=1 // pred_check
      %p329 = pneg %p133
    $region31: #{tpu_custom_call.1} parent=1 // pred_check_branch
      %331 = sbr.rel (%p329) target = $region33
    $region32: #{tpu_custom_call.1} parent=1 // pred_region
      %v332 = vld [vmem:[#allocation2] sm:$0xff]
      %v333 = vld [vmem:[#allocation2 + $0x8] sm:$0xff]
      %v334 = vadd.f32 %v332, %v333
      %335 = vadd.xlane.f32.xlu0 %v334
      %v336 = vpop.xlane.xlu0 %335
      %vm337 = vcmask 7168
      %338 = vst.msk [vmem:[#allocation10] sm:$0xff] %vm337, %v336
      %v339 = vld [vmem:[#allocation3] sm:$0xff]
      %v340 = vld [vmem:[#allocation3 + $0x8] sm:$0xff]
      %v341 = vadd.f32 %v339, %v340
      %342 = vadd.xlane.f32.xlu0 %v341
      %v343 = vpop.xlane.xlu0 %342
      %344 = vst.msk [vmem:[#allocation11] sm:$0xff] %vm337, %v343
      %v345 = vld [vmem:[#allocation4] sm:$0xff]
      %v346 = vld [vmem:[#allocation4 + $0x8] sm:$0xff]
      %v347 = vadd.f32 %v345, %v346
      %348 = vadd.xlane.f32.xlu0 %v347
      %v349 = vpop.xlane.xlu0 %348
      %350 = vst.msk [vmem:[#allocation12] sm:$0xff] %vm337, %v349
      %v351 = vld [vmem:[#allocation5] sm:$0xff]
      %v352 = vld [vmem:[#allocation5 + $0x8] sm:$0xff]
      %v353 = vadd.f32 %v351, %v352
      %354 = vadd.xlane.f32.xlu0 %v353
      %v355 = vpop.xlane.xlu0 %354
      %356 = vst.msk [vmem:[#allocation13] sm:$0xff] %vm337, %v355
    $region33: #{tpu_custom_call.1} parent=1 // pred_fallthru
      _
    // Predicated region
    $region34: #{tpu_custom_call.1} parent=1 // pred_check
      _
    $region35: #{tpu_custom_call.1} parent=1 // pred_check_branch
      %358 = sbr.rel (0) target = $region37
    $region36: #{tpu_custom_call.1} parent=1 // pred_region
      // Predicated region
      $region38: #{tpu_custom_call.1} parent=36 // pred_check
        _
      $region39: #{tpu_custom_call.1} parent=36 // pred_check_branch
        %360 = sbr.rel (0) target = $region41
      $region40: #{tpu_custom_call.1} parent=36 // pred_region
        // Predicated region
        $region42: #{tpu_custom_call.1} parent=40 // pred_check
          _
        $region43: #{tpu_custom_call.1} parent=40 // pred_check_branch
          %362 = sbr.rel target = $region45
        $region44: #{tpu_custom_call.1} parent=40 // pred_region
          // Predicated region
          $region57: #{tpu_custom_call.1} parent=44 // pred_check
            _
          $region58: #{tpu_custom_call.1} parent=44 // pred_check_branch
            %377 = sbr.rel (0) target = $region60
          $region59: #{tpu_custom_call.1} parent=44 // pred_region
            loop: start=0, step=1, limit=1
            $region61: #{tpu_custom_call.1} parent=59 // loop_pre_header
              _
            $region62: #{tpu_custom_call.1} parent=59 // loop_header
              %s380 = sphi 0, %s384
              %p381 = scmp.ge.s32.totalorder %s380, 1
              %s385 = sphi [#allocation10], [#allocation10]
              %s386 = sphi %s4, %s4
            $region63: #{tpu_custom_call.1} parent=59 // loop_header_branch
              %383 = sbr.rel (%p381) target = $region67
            $region64: #{tpu_custom_call.1} parent=59 // loop_body
              %v387 = vld [vmem:[%s385] sm:$0x3]
              %388 = vst [vmem:[%s386] sm:$0x3] %v387
            $region65: #{tpu_custom_call.1} parent=59 // loop_footer
              %s384 = sadd.s32 1, %s380
            $region66: #{tpu_custom_call.1} parent=59 // loop_footer_branch
              %379 = sbr.rel target = $region62
            $region67: #{tpu_custom_call.1} parent=59 // loop_exit
              _
          $region60: #{tpu_custom_call.1} parent=44 // pred_fallthru
            _
        $region45: #{tpu_custom_call.1} parent=40 // pred_fallthru
          _
        // Predicated region
        $region46: #{tpu_custom_call.1} parent=40 // pred_check
          _
        $region47: #{tpu_custom_call.1} parent=40 // pred_check_branch
          %364 = sbr.rel (0) target = $region49
        $region48: #{tpu_custom_call.1} parent=40 // pred_region
          loop: start=0, step=1, limit=1
          $region50: #{tpu_custom_call.1} parent=48 // loop_pre_header
            _
          $region51: #{tpu_custom_call.1} parent=48 // loop_header
            %s367 = sphi 0, %s371
            %p368 = scmp.ge.s32.totalorder %s367, 1
            %s372 = sphi [#allocation10], [#allocation10]
            %s373 = sphi %s4, %s4
          $region52: #{tpu_custom_call.1} parent=48 // loop_header_branch
            %370 = sbr.rel (%p368) target = $region56
          $region53: #{tpu_custom_call.1} parent=48 // loop_body
            %v374 = vld [vmem:[%s372] sm:$0x3]
            %375 = vst [vmem:[%s373] sm:$0x3] %v374
          $region54: #{tpu_custom_call.1} parent=48 // loop_footer
            %s371 = sadd.s32 1, %s367
          $region55: #{tpu_custom_call.1} parent=48 // loop_footer_branch
            %366 = sbr.rel target = $region51
          $region56: #{tpu_custom_call.1} parent=48 // loop_exit
            _
        $region49: #{tpu_custom_call.1} parent=40 // pred_fallthru
          _
      $region41: #{tpu_custom_call.1} parent=36 // pred_fallthru
        _
      %389 = vnop
    $region37: #{tpu_custom_call.1} parent=1 // pred_fallthru
      _
    // Predicated region
    $region68: #{tpu_custom_call.1} parent=1 // pred_check
      _
    $region69: #{tpu_custom_call.1} parent=1 // pred_check_branch
      %391 = sbr.rel (0) target = $region71
    $region70: #{tpu_custom_call.1} parent=1 // pred_region
      // Predicated region
      $region72: #{tpu_custom_call.1} parent=70 // pred_check
        _
      $region73: #{tpu_custom_call.1} parent=70 // pred_check_branch
        %393 = sbr.rel (0) target = $region75
      $region74: #{tpu_custom_call.1} parent=70 // pred_region
        // Predicated region
        $region76: #{tpu_custom_call.1} parent=74 // pred_check
          _
        $region77: #{tpu_custom_call.1} parent=74 // pred_check_branch
          %395 = sbr.rel target = $region79
        $region78: #{tpu_custom_call.1} parent=74 // pred_region
          // Predicated region
          $region91: #{tpu_custom_call.1} parent=78 // pred_check
            _
          $region92: #{tpu_custom_call.1} parent=78 // pred_check_branch
            %410 = sbr.rel (0) target = $region94
          $region93: #{tpu_custom_call.1} parent=78 // pred_region
            loop: start=0, step=1, limit=1
            $region95: #{tpu_custom_call.1} parent=93 // loop_pre_header
              _
            $region96: #{tpu_custom_call.1} parent=93 // loop_header
              %s413 = sphi 0, %s417
              %p414 = scmp.ge.s32.totalorder %s413, 1
              %s418 = sphi [#allocation11], [#allocation11]
              %s419 = sphi %s5, %s5
            $region97: #{tpu_custom_call.1} parent=93 // loop_header_branch
              %416 = sbr.rel (%p414) target = $region101
            $region98: #{tpu_custom_call.1} parent=93 // loop_body
              %v420 = vld [vmem:[%s418] sm:$0x3]
              %421 = vst [vmem:[%s419] sm:$0x3] %v420
            $region99: #{tpu_custom_call.1} parent=93 // loop_footer
              %s417 = sadd.s32 1, %s413
            $region100: #{tpu_custom_call.1} parent=93 // loop_footer_branch
              %412 = sbr.rel target = $region96
            $region101: #{tpu_custom_call.1} parent=93 // loop_exit
              _
          $region94: #{tpu_custom_call.1} parent=78 // pred_fallthru
            _
        $region79: #{tpu_custom_call.1} parent=74 // pred_fallthru
          _
        // Predicated region
        $region80: #{tpu_custom_call.1} parent=74 // pred_check
          _
        $region81: #{tpu_custom_call.1} parent=74 // pred_check_branch
          %397 = sbr.rel (0) target = $region83
        $region82: #{tpu_custom_call.1} parent=74 // pred_region
          loop: start=0, step=1, limit=1
          $region84: #{tpu_custom_call.1} parent=82 // loop_pre_header
            _
          $region85: #{tpu_custom_call.1} parent=82 // loop_header
            %s400 = sphi 0, %s404
            %p401 = scmp.ge.s32.totalorder %s400, 1
            %s405 = sphi [#allocation11], [#allocation11]
            %s406 = sphi %s5, %s5
          $region86: #{tpu_custom_call.1} parent=82 // loop_header_branch
            %403 = sbr.rel (%p401) target = $region90
          $region87: #{tpu_custom_call.1} parent=82 // loop_body
            %v407 = vld [vmem:[%s405] sm:$0x3]
            %408 = vst [vmem:[%s406] sm:$0x3] %v407
          $region88: #{tpu_custom_call.1} parent=82 // loop_footer
            %s404 = sadd.s32 1, %s400
          $region89: #{tpu_custom_call.1} parent=82 // loop_footer_branch
            %399 = sbr.rel target = $region85
          $region90: #{tpu_custom_call.1} parent=82 // loop_exit
            _
        $region83: #{tpu_custom_call.1} parent=74 // pred_fallthru
          _
      $region75: #{tpu_custom_call.1} parent=70 // pred_fallthru
        _
      %422 = vnop
    $region71: #{tpu_custom_call.1} parent=1 // pred_fallthru
      _
    // Predicated region
    $region102: #{tpu_custom_call.1} parent=1 // pred_check
      _
    $region103: #{tpu_custom_call.1} parent=1 // pred_check_branch
      %424 = sbr.rel (0) target = $region105
    $region104: #{tpu_custom_call.1} parent=1 // pred_region
      // Predicated region
      $region106: #{tpu_custom_call.1} parent=104 // pred_check
        _
      $region107: #{tpu_custom_call.1} parent=104 // pred_check_branch
        %426 = sbr.rel (0) target = $region109
      $region108: #{tpu_custom_call.1} parent=104 // pred_region
        // Predicated region
        $region110: #{tpu_custom_call.1} parent=108 // pred_check
          _
        $region111: #{tpu_custom_call.1} parent=108 // pred_check_branch
          %428 = sbr.rel target = $region113
        $region112: #{tpu_custom_call.1} parent=108 // pred_region
          // Predicated region
          $region125: #{tpu_custom_call.1} parent=112 // pred_check
            _
          $region126: #{tpu_custom_call.1} parent=112 // pred_check_branch
            %443 = sbr.rel (0) target = $region128
          $region127: #{tpu_custom_call.1} parent=112 // pred_region
            loop: start=0, step=1, limit=1
            $region129: #{tpu_custom_call.1} parent=127 // loop_pre_header
              _
            $region130: #{tpu_custom_call.1} parent=127 // loop_header
              %s446 = sphi 0, %s450
              %p447 = scmp.ge.s32.totalorder %s446, 1
              %s451 = sphi [#allocation12], [#allocation12]
              %s452 = sphi %s6, %s6
            $region131: #{tpu_custom_call.1} parent=127 // loop_header_branch
              %449 = sbr.rel (%p447) target = $region135
            $region132: #{tpu_custom_call.1} parent=127 // loop_body
              %v453 = vld [vmem:[%s451] sm:$0x3]
              %454 = vst [vmem:[%s452] sm:$0x3] %v453
            $region133: #{tpu_custom_call.1} parent=127 // loop_footer
              %s450 = sadd.s32 1, %s446
            $region134: #{tpu_custom_call.1} parent=127 // loop_footer_branch
              %445 = sbr.rel target = $region130
            $region135: #{tpu_custom_call.1} parent=127 // loop_exit
              _
          $region128: #{tpu_custom_call.1} parent=112 // pred_fallthru
            _
        $region113: #{tpu_custom_call.1} parent=108 // pred_fallthru
          _
        // Predicated region
        $region114: #{tpu_custom_call.1} parent=108 // pred_check
          _
        $region115: #{tpu_custom_call.1} parent=108 // pred_check_branch
          %430 = sbr.rel (0) target = $region117
        $region116: #{tpu_custom_call.1} parent=108 // pred_region
          loop: start=0, step=1, limit=1
          $region118: #{tpu_custom_call.1} parent=116 // loop_pre_header
            _
          $region119: #{tpu_custom_call.1} parent=116 // loop_header
            %s433 = sphi 0, %s437
            %p434 = scmp.ge.s32.totalorder %s433, 1
            %s438 = sphi [#allocation12], [#allocation12]
            %s439 = sphi %s6, %s6
          $region120: #{tpu_custom_call.1} parent=116 // loop_header_branch
            %436 = sbr.rel (%p434) target = $region124
          $region121: #{tpu_custom_call.1} parent=116 // loop_body
            %v440 = vld [vmem:[%s438] sm:$0x3]
            %441 = vst [vmem:[%s439] sm:$0x3] %v440
          $region122: #{tpu_custom_call.1} parent=116 // loop_footer
            %s437 = sadd.s32 1, %s433
          $region123: #{tpu_custom_call.1} parent=116 // loop_footer_branch
            %432 = sbr.rel target = $region119
          $region124: #{tpu_custom_call.1} parent=116 // loop_exit
            _
        $region117: #{tpu_custom_call.1} parent=108 // pred_fallthru
          _
      $region109: #{tpu_custom_call.1} parent=104 // pred_fallthru
        _
      %455 = vnop
    $region105: #{tpu_custom_call.1} parent=1 // pred_fallthru
      _
    // Predicated region
    $region136: #{tpu_custom_call.1} parent=1 // pred_check
      _
    $region137: #{tpu_custom_call.1} parent=1 // pred_check_branch
      %457 = sbr.rel (0) target = $region139
    $region138: #{tpu_custom_call.1} parent=1 // pred_region
      // Predicated region
      $region140: #{tpu_custom_call.1} parent=138 // pred_check
        _
      $region141: #{tpu_custom_call.1} parent=138 // pred_check_branch
        %459 = sbr.rel (0) target = $region143
      $region142: #{tpu_custom_call.1} parent=138 // pred_region
        // Predicated region
        $region144: #{tpu_custom_call.1} parent=142 // pred_check
          _
        $region145: #{tpu_custom_call.1} parent=142 // pred_check_branch
          %461 = sbr.rel target = $region147
        $region146: #{tpu_custom_call.1} parent=142 // pred_region
          // Predicated region
          $region159: #{tpu_custom_call.1} parent=146 // pred_check
            _
          $region160: #{tpu_custom_call.1} parent=146 // pred_check_branch
            %476 = sbr.rel (0) target = $region162
          $region161: #{tpu_custom_call.1} parent=146 // pred_region
            loop: start=0, step=1, limit=1
            $region163: #{tpu_custom_call.1} parent=161 // loop_pre_header
              _
            $region164: #{tpu_custom_call.1} parent=161 // loop_header
              %s479 = sphi 0, %s483
              %p480 = scmp.ge.s32.totalorder %s479, 1
              %s484 = sphi [#allocation13], [#allocation13]
              %s485 = sphi %s7, %s7
            $region165: #{tpu_custom_call.1} parent=161 // loop_header_branch
              %482 = sbr.rel (%p480) target = $region169
            $region166: #{tpu_custom_call.1} parent=161 // loop_body
              %v486 = vld [vmem:[%s484] sm:$0x3]
              %487 = vst [vmem:[%s485] sm:$0x3] %v486
            $region167: #{tpu_custom_call.1} parent=161 // loop_footer
              %s483 = sadd.s32 1, %s479
            $region168: #{tpu_custom_call.1} parent=161 // loop_footer_branch
              %478 = sbr.rel target = $region164
            $region169: #{tpu_custom_call.1} parent=161 // loop_exit
              _
          $region162: #{tpu_custom_call.1} parent=146 // pred_fallthru
            _
        $region147: #{tpu_custom_call.1} parent=142 // pred_fallthru
          _
        // Predicated region
        $region148: #{tpu_custom_call.1} parent=142 // pred_check
          _
        $region149: #{tpu_custom_call.1} parent=142 // pred_check_branch
          %463 = sbr.rel (0) target = $region151
        $region150: #{tpu_custom_call.1} parent=142 // pred_region
          loop: start=0, step=1, limit=1
          $region152: #{tpu_custom_call.1} parent=150 // loop_pre_header
            _
          $region153: #{tpu_custom_call.1} parent=150 // loop_header
            %s466 = sphi 0, %s470
            %p467 = scmp.ge.s32.totalorder %s466, 1
            %s471 = sphi [#allocation13], [#allocation13]
            %s472 = sphi %s7, %s7
          $region154: #{tpu_custom_call.1} parent=150 // loop_header_branch
            %469 = sbr.rel (%p467) target = $region158
          $region155: #{tpu_custom_call.1} parent=150 // loop_body
            %v473 = vld [vmem:[%s471] sm:$0x3]
            %474 = vst [vmem:[%s472] sm:$0x3] %v473
          $region156: #{tpu_custom_call.1} parent=150 // loop_footer
            %s470 = sadd.s32 1, %s466
          $region157: #{tpu_custom_call.1} parent=150 // loop_footer_branch
            %465 = sbr.rel target = $region153
          $region158: #{tpu_custom_call.1} parent=150 // loop_exit
            _
        $region151: #{tpu_custom_call.1} parent=142 // pred_fallthru
          _
      $region143: #{tpu_custom_call.1} parent=138 // pred_fallthru
        _
      %488 = vnop
    $region139: #{tpu_custom_call.1} parent=1 // pred_fallthru
      _
    // Predicated region
    $region170: #{tpu_custom_call.1} parent=1 // pred_check
      _
    $region171: #{tpu_custom_call.1} parent=1 // pred_check_branch
      %490 = sbr.rel (0) target = $region173
    $region172: #{tpu_custom_call.1} parent=1 // pred_region
      _
    $region173: #{tpu_custom_call.1} parent=1 // pred_fallthru
      _
    // Predicated region
    $region174: #{tpu_custom_call.1} parent=1 // pred_check
      _
    $region175: #{tpu_custom_call.1} parent=1 // pred_check_branch
      %492 = sbr.rel (0) target = $region177
    $region176: #{tpu_custom_call.1} parent=1 // pred_region
      _
    $region177: #{tpu_custom_call.1} parent=1 // pred_fallthru
      _
    // Predicated region
    $region178: #{tpu_custom_call.1} parent=1 // pred_check
      _
    $region179: #{tpu_custom_call.1} parent=1 // pred_check_branch
      %494 = sbr.rel (0) target = $region181
    $region180: #{tpu_custom_call.1} parent=1 // pred_region
      _
    $region181: #{tpu_custom_call.1} parent=1 // pred_fallthru
      _
    // Predicated region
    $region182: #{tpu_custom_call.1} parent=1 // pred_check
      _
    $region183: #{tpu_custom_call.1} parent=1 // pred_check_branch
      %496 = sbr.rel (0) target = $region185
    $region184: #{tpu_custom_call.1} parent=1 // pred_region
      _
    $region185: #{tpu_custom_call.1} parent=1 // pred_fallthru
      _
    %497 = vsyncpa [#allocation7], 1
    %498 = vsyncpa [#allocation9], 1

</llo_original>
